<compile_context>
chip_gen: v5e
topology: v5e:2x2
jax: 0.10.0
libtpu: 0.0.40
codegen_flags: <defaults>
</compile_context>

<pallas_src>
import functools

import jax
import jax.numpy as jnp
from jax import lax
from jax.experimental import pallas as pl
from jax.experimental.pallas import tpu as pltpu

LANES = 128
SUBLANES = 8
CHUNK_ROWS = 128                          # rows per inner accumulation step
BLOCK_BYTES_PER_INPUT = 4 * 1024 * 1024   # ~4 MiB of each input per grid step


def _chunk_partial_sums(x_ref, t_ref, r0, nrows, valid_in_block):
    """(8,128) f32 partial sums of x*t and t*t over block rows [r0, r0+nrows).

    Requires nrows % 8 == 0.  `valid_in_block` (traced scalar or None) masks
    rows at-or-beyond the valid row count of this block (ragged/phantom edge).
    """
    xc = x_ref[pl.ds(r0, nrows), :].astype(jnp.float32)
    tc = t_ref[pl.ds(r0, nrows), :].astype(jnp.float32)
    if valid_in_block is not None:
        row_id = lax.broadcasted_iota(jnp.int32, (nrows, LANES), 0) + r0
        keep = row_id < valid_in_block
        xc = jnp.where(keep, xc, 0.0)
        tc = jnp.where(keep, tc, 0.0)
    g = nrows // SUBLANES
    xt = (xc * tc).reshape(g, SUBLANES, LANES).sum(axis=0)   # pure VPU vreg adds
    tt = (tc * tc).reshape(g, SUBLANES, LANES).sum(axis=0)
    return xt, tt


def _qdl_kernel(x_ref, t_ref, o_ref, *, rows, block_rows, blocks_per_seg,
                chunk_rows, edge_possible):
    seg = pl.program_id(0)   # "parallel" segment axis (megacore-shardable)
    j = pl.program_id(1)     # "arbitrary" reduction axis within the segment

    @pl.when(j == 0)
    def _init():
        o_ref[...] = jnp.zeros_like(o_ref)

    n_chunks = block_rows // chunk_rows
    rem_rows = block_rows - n_chunks * chunk_rows   # >0 only for 1-block inputs
    assert not (rem_rows and edge_possible)

    def accumulate(valid_in_block):
        if chunk_rows % SUBLANES == 0:
            def body(c, carry):
                acc_xt, acc_tt = carry
                r0 = pl.multiple_of(c * chunk_rows, chunk_rows)
                xt, tt = _chunk_partial_sums(x_ref, t_ref, r0, chunk_rows,
                                             valid_in_block)
                return acc_xt + xt, acc_tt + tt

            zero = jnp.zeros((SUBLANES, LANES), jnp.float32)
            acc_xt, acc_tt = lax.fori_loop(0, n_chunks, body, (zero, zero))
            o_ref[0, 0, :, :] += acc_xt
            o_ref[0, 1, :, :] += acc_tt
            if rem_rows:    # static; mask-free (single-block inputs only)
                r0 = n_chunks * chunk_rows
                xc = x_ref[pl.ds(r0, rem_rows), :].astype(jnp.float32)
                tc = t_ref[pl.ds(r0, rem_rows), :].astype(jnp.float32)
                o_ref[0, 0, 0:1, :] += jnp.sum(xc * tc, axis=0, keepdims=True)
                o_ref[0, 1, 0:1, :] += jnp.sum(tc * tc, axis=0, keepdims=True)
        else:
            # Tiny single-block input (< 128 rows, not a multiple of 8): one
            # cross-sublane reduce; never on the streaming hot path.
            xc = x_ref[...].astype(jnp.float32)
            tc = t_ref[...].astype(jnp.float32)
            o_ref[0, 0, 0:1, :] += jnp.sum(xc * tc, axis=0, keepdims=True)
            o_ref[0, 1, 0:1, :] += jnp.sum(tc * tc, axis=0, keepdims=True)

    if edge_possible:
        blk = seg * blocks_per_seg + j               # un-clamped global block id
        is_edge = (blk + 1) * block_rows > rows      # ragged or phantom block

        @pl.when(jnp.logical_not(is_edge))
        def _full():
            accumulate(None)                         # mask-free hot path

        @pl.when(is_edge)
        def _edge():
            accumulate(rows - blk * block_rows)      # <= 0 for phantom -> all zero
    else:
        accumulate(None)


def quant_distribution_loss(inp: jax.Array, target: jax.Array) -> jax.Array:
    """|sum(input*target) / sum(target*target) - 1| as a 0-d float32 scalar."""
    assert inp.shape == target.shape, "input/target must match in shape"

    x = inp.reshape(-1)        # keep native dtype; per-chunk cast in VMEM
    t = target.reshape(-1)
    n = x.shape[0]
    if n == 0:                 # empty -> 0/0 -> NaN, like the PyTorch module
        z = jnp.float32(0.0)
        return jnp.abs(z / z - 1.0)

    # Reshape to (rows, 128).  A padded copy is only made when numel % 128 != 0
    # (rare for NN tensors); padding zeros contribute 0 to both sums.
    pad = (-n) % LANES
    if pad:
        x = jnp.pad(x, (0, pad))
        t = jnp.pad(t, (0, pad))
    rows = (n + pad) // LANES
    x2d = x.reshape(rows, LANES)
    t2d = t.reshape(rows, LANES)

    # Dtype-aware block size: constant ~4 MiB of each input per grid step.
    itemsize = max(x2d.dtype.itemsize, t2d.dtype.itemsize)
    max_block_rows = max(BLOCK_BYTES_PER_INPUT // (LANES * itemsize), CHUNK_ROWS)

    if rows <= max_block_rows:
        block_rows = rows               # single exact block (always legal)
    else:
        block_rows = max_block_rows     # multiple of CHUNK_ROWS
    num_blocks = pl.cdiv(rows, block_rows)

    # Always 2 segments when there are >= 2 blocks (v7x: one per TensorCore).
    num_seg = 2 if num_blocks >= 2 else 1
    blocks_per_seg = pl.cdiv(num_blocks, num_seg)

    chunk_rows = min(CHUNK_ROWS, block_rows)
    edge_possible = (rows % block_rows != 0) or (num_seg * blocks_per_seg != num_blocks)
    if block_rows % chunk_rows or chunk_rows % SUBLANES:
        # Irregular chunking only arises for single-block inputs (no edge blocks).
        assert not edge_possible

    last_block = num_blocks - 1

    def in_map(s, j):
        # Clamp so the phantom trailing step (odd num_blocks split 2 ways) maps
        # to a real block; its contribution is masked to zero in the kernel.
        return (jnp.minimum(s * blocks_per_seg + j, last_block), 0)

    kernel = functools.partial(
        _qdl_kernel, rows=rows, block_rows=block_rows,
        blocks_per_seg=blocks_per_seg, chunk_rows=chunk_rows,
        edge_possible=edge_possible)

    block_bytes = block_rows * LANES * (x2d.dtype.itemsize + t2d.dtype.itemsize)
    vmem_limit = int(min(max(2 * block_bytes + (4 << 20), 16 << 20), 48 << 20))

    out = pl.pallas_call(
        kernel,
        out_shape=jax.ShapeDtypeStruct((num_seg, 2, SUBLANES, LANES), jnp.float32),
        grid_spec=pltpu.PrefetchScalarGridSpec(
            num_scalar_prefetch=0,
            grid=(num_seg, blocks_per_seg),
            in_specs=[pl.BlockSpec((block_rows, LANES), in_map),
                      pl.BlockSpec((block_rows, LANES), in_map)],
            out_specs=pl.BlockSpec((1, 2, SUBLANES, LANES),
                                   lambda s, j: (s, 0, 0, 0)),
        ),
        compiler_params=pltpu.CompilerParams(
            # TODO(synk): on v7x verify "parallel" really shards the segment axis
            # across both TensorCores; if not, switch this axis to CORE_PARALLEL.
            dimension_semantics=("parallel", "arbitrary"),
            vmem_limit_bytes=vmem_limit,
        ),
        cost_estimate=pl.CostEstimate(
            flops=4 * n,
            transcendentals=0,
            bytes_accessed=n * (x2d.dtype.itemsize + t2d.dtype.itemsize)
            + num_seg * 2 * SUBLANES * LANES * 4,
        ),
    )(x2d, t2d)

    # Tiny XLA epilogue: combine per-segment partial tiles, divide, |k - 1|.
    sum_xt = out[:, 0].sum()
    sum_tt = out[:, 1].sum()
    return jnp.abs(sum_xt / sum_tt - 1.0)


def _reference(inp, target):
    inp = inp.astype(jnp.float32)
    target = target.astype(jnp.float32)
    k = (inp * target).sum() / (target * target).sum()
    return jnp.abs(k - 1.0)


if __name__ == "__main__":
    key = jax.random.PRNGKey(0)
    k1, k2, k3, k4, k5, k6 = jax.random.split(key, 6)

    # Primary: small conv-like NCHW activations, as the module is typically used.
    x = jax.random.normal(k1, (2, 4, 16, 16), dtype=jnp.float32)
    tgt = jax.random.normal(k2, (2, 4, 16, 16), dtype=jnp.float32)
    loss = quant_distribution_loss(x, tgt)
    jax.block_until_ready(loss)
    assert jnp.allclose(loss, _reference(x, tgt), rtol=1e-5, atol=1e-6), loss

    # Multi-block / 2-segment / ragged-edge path (rows > one block).
    x2 = jax.random.normal(k3, (4, 64, 64, 72), dtype=jnp.float32)
    t2 = jax.random.normal(k4, (4, 64, 64, 72), dtype=jnp.float32)
    loss2 = quant_distribution_loss(x2, t2)
    jax.block_until_ready(loss2)
    assert jnp.allclose(loss2, _reference(x2, t2), rtol=1e-4, atol=1e-4), loss2

    # Tiny, non-multiple-of-128 numel (pad + odd-row path), bf16 inputs.
    x3 = jax.random.normal(k5, (3, 5, 7, 11), dtype=jnp.bfloat16)
    t3 = jax.random.normal(k6, (3, 5, 7, 11), dtype=jnp.bfloat16)
    loss3 = quant_distribution_loss(x3, t3)
    jax.block_until_ready(loss3)
    assert jnp.allclose(loss3, _reference(x3, t3), rtol=2e-2, atol=2e-2), loss3

    print("KERNEL_OK")
</pallas_src>

<mosaic_0001>
module attributes {stable_mosaic.version = 11 : i64} {
  func.func @_qdl_kernel(%arg0: i32, %arg1: i32, %arg2: memref<16x128xf32, #tpu.memory_space<vmem>>, %arg3: memref<16x128xf32, #tpu.memory_space<vmem>>, %arg4: memref<1x2x8x128xf32, #tpu.memory_space<vmem>>) attributes {dimension_semantics = [#tpu.dimension_semantics<parallel>, #tpu.dimension_semantics<arbitrary>], iteration_bounds = array<i64: 1, 1>, scalar_prefetch = 0 : i64, scratch_operands = 0 : i64, tpu.core_type = #tpu.core_type<tc>, window_params = [{transform_indices = @transform_0, window_bounds = array<i64: 16, 128>}, {transform_indices = @transform_1, window_bounds = array<i64: 16, 128>}, {transform_indices = @transform_2, window_bounds = array<i64: 1, 2, 8, 128>}]} {
    %c0_i32 = arith.constant 0 : i32
    %0 = arith.cmpi eq, %arg1, %c0_i32 : i32
    %1 = arith.extui %0 : i1 to i32
    %c0_i32_0 = arith.constant 0 : i32
    %2 = arith.cmpi ne, %1, %c0_i32_0 : i32
    scf.if %2 {
      %cst_20 = arith.constant 0.000000e+00 : f32
      %30 = vector.broadcast %cst_20 : f32 to vector<1x2x8x128xf32>
      %c0_21 = arith.constant 0 : index
      %c0_22 = arith.constant 0 : index
      %c0_23 = arith.constant 0 : index
      %c0_24 = arith.constant 0 : index
      %31 = vector.load %arg4[%c0_21, %c0_22, %c0_23, %c0_24] : memref<1x2x8x128xf32, #tpu.memory_space<vmem>>, vector<1x2x8x128xf32>
      tpu.vector_store %arg4[%c0_21, %c0_22, %c0_23, %c0_24], %30 {strides = array<i32>} : memref<1x2x8x128xf32, #tpu.memory_space<vmem>>, vector<1x2x8x128xf32>,
    } else {
    }
    %cst = arith.constant 0.000000e+00 : f32
    %3 = vector.broadcast %cst : f32 to vector<8x128xf32>
    %c0_i32_1 = arith.constant 0 : i32
    %c16_i32 = arith.constant 16 : i32
    %4 = arith.muli %c0_i32_1, %c16_i32 : i32
    %5 = tpu.assume_multiple %4, 16 : i32
    %6 = arith.index_cast %5 : i32 to index
    %c0 = arith.constant 0 : index
    %7 = vector.load %arg2[%6, %c0] : memref<16x128xf32, #tpu.memory_space<vmem>>, vector<16x128xf32>
    %8 = arith.index_cast %5 : i32 to index
    %c0_2 = arith.constant 0 : index
    %9 = vector.load %arg3[%8, %c0_2] : memref<16x128xf32, #tpu.memory_space<vmem>>, vector<16x128xf32>
    %10 = arith.mulf %7, %9 : vector<16x128xf32>
    %11 = vector.shape_cast %10 : vector<16x128xf32> to vector<2x8x128xf32>
    %cst_3 = arith.constant dense<0.000000e+00> : vector<8x128xf32>
    %12 = vector.multi_reduction <add>, %11, %cst_3 [0] : vector<2x8x128xf32> to vector<8x128xf32>
    %13 = arith.mulf %9, %9 : vector<16x128xf32>
    %14 = vector.shape_cast %13 : vector<16x128xf32> to vector<2x8x128xf32>
    %cst_4 = arith.constant dense<0.000000e+00> : vector<8x128xf32>
    %15 = vector.multi_reduction <add>, %14, %cst_4 [0] : vector<2x8x128xf32> to vector<8x128xf32>
    %16 = arith.addf %3, %12 : vector<8x128xf32>
    %17 = arith.addf %3, %15 : vector<8x128xf32>
    %c1_i32 = arith.constant 1 : i32
    %c0_5 = arith.constant 0 : index
    %c0_6 = arith.constant 0 : index
    %c0_7 = arith.constant 0 : index
    %c0_8 = arith.constant 0 : index
    %18 = vector.load %arg4[%c0_5, %c0_6, %c0_7, %c0_8] : memref<1x2x8x128xf32, #tpu.memory_space<vmem>>, vector<1x1x8x128xf32>
    %19 = vector.shape_cast %18 : vector<1x1x8x128xf32> to vector<8x128xf32>
    %20 = arith.addf %19, %16 : vector<8x128xf32>
    %c0_9 = arith.constant 0 : index
    %c0_10 = arith.constant 0 : index
    %c0_11 = arith.constant 0 : index
    %c0_12 = arith.constant 0 : index
    %21 = vector.load %arg4[%c0_9, %c0_10, %c0_11, %c0_12] : memref<1x2x8x128xf32, #tpu.memory_space<vmem>>, vector<1x1x8x128xf32>
    %22 = vector.shape_cast %21 : vector<1x1x8x128xf32> to vector<8x128xf32>
    %23 = vector.shape_cast %20 : vector<8x128xf32> to vector<1x1x8x128xf32>
    tpu.vector_store %arg4[%c0_9, %c0_10, %c0_11, %c0_12], %23 {strides = array<i32>} : memref<1x2x8x128xf32, #tpu.memory_space<vmem>>, vector<1x1x8x128xf32>,
    %c0_13 = arith.constant 0 : index
    %c1 = arith.constant 1 : index
    %c0_14 = arith.constant 0 : index
    %c0_15 = arith.constant 0 : index
    %24 = vector.load %arg4[%c0_13, %c1, %c0_14, %c0_15] : memref<1x2x8x128xf32, #tpu.memory_space<vmem>>, vector<1x1x8x128xf32>
    %25 = vector.shape_cast %24 : vector<1x1x8x128xf32> to vector<8x128xf32>
    %26 = arith.addf %25, %17 : vector<8x128xf32>
    %c0_16 = arith.constant 0 : index
    %c1_17 = arith.constant 1 : index
    %c0_18 = arith.constant 0 : index
    %c0_19 = arith.constant 0 : index
    %27 = vector.load %arg4[%c0_16, %c1_17, %c0_18, %c0_19] : memref<1x2x8x128xf32, #tpu.memory_space<vmem>>, vector<1x1x8x128xf32>
    %28 = vector.shape_cast %27 : vector<1x1x8x128xf32> to vector<8x128xf32>
    %29 = vector.shape_cast %26 : vector<8x128xf32> to vector<1x1x8x128xf32>
    tpu.vector_store %arg4[%c0_16, %c1_17, %c0_18, %c0_19], %29 {strides = array<i32>} : memref<1x2x8x128xf32, #tpu.memory_space<vmem>>, vector<1x1x8x128xf32>,
    return
  }
  func.func @transform_0(%arg0: i32, %arg1: i32) -> (i32, i32) {
    %c1_i32 = arith.constant 1 : i32
    %0 = arith.muli %arg0, %c1_i32 : i32
    %1 = arith.addi %0, %arg1 : i32
    %c0_i32 = arith.constant 0 : i32
    %2 = arith.minsi %1, %c0_i32 : i32
    %c0_i32_0 = arith.constant 0 : i32
    %c0_i32_1 = arith.constant 0 : i32
    return %2, %c0_i32_0 : i32, i32
  }
  func.func @transform_1(%arg0: i32, %arg1: i32) -> (i32, i32) {
    %c1_i32 = arith.constant 1 : i32
    %0 = arith.muli %arg0, %c1_i32 : i32
    %1 = arith.addi %0, %arg1 : i32
    %c0_i32 = arith.constant 0 : i32
    %2 = arith.minsi %1, %c0_i32 : i32
    %c0_i32_0 = arith.constant 0 : i32
    %c0_i32_1 = arith.constant 0 : i32
    return %2, %c0_i32_0 : i32, i32
  }
  func.func @transform_2(%arg0: i32, %arg1: i32) -> (i32, i32, i32, i32) {
    %c0_i32 = arith.constant 0 : i32
    %c0_i32_0 = arith.constant 0 : i32
    %c0_i32_1 = arith.constant 0 : i32
    %c0_i32_2 = arith.constant 0 : i32
    return %arg0, %c0_i32, %c0_i32_0, %c0_i32_1 : i32, i32, i32, i32
  }
}

</mosaic_0001>

<llo_original>
// kernel: tpu_custom_call.1
$region0: #{tpu_custom_call.1}
  #allocation0 [shape = 'u32[]', space=smem, size = 0x4, offset = 0x4, fixed_abs, tag = 'smem constant byte address 0x4 - core index']
  #allocation1 [shape = 'u32[72,128]{1,0:T(1,128)}', space=vmem, size = 0x9000, scoped, tag = 'internal scratch']
  %s0 = inlined_call_operand.hbm [shape: f32[16,128], index: 0, kind: input, shape index: {}]
  %s1 = inlined_call_operand.hbm [shape: f32[16,128], index: 1, kind: input, shape index: {}]
  %s2 = inlined_call_operand.hbm [shape: f32[1,2,8,128], index: 2, kind: output, shape index: {}]
  %s3 = sld [smem:[#allocation0]]
  $region30: #{tpu_custom_call.1} parent=0
    _
  %s5 = ssub.s32 1, %s3
  %s6 = scalar_select 0, %s5, %s3
  $region1: #{tpu_custom_call.1} parent=0
    #allocation2 [shape = 'u8[8192]{0}', space=vmem, size = 0x2000, scoped, tag = 'input window, operand 0, single buffered']
    #allocation3 [shape = 's32[1]{0}', space=sflag, size = 0x4, scoped, tag = 'scoped memory for tpu_custom_call.1']
    #allocation4 [shape = 's32[1]{0}', space=sflag, size = 0x4, scoped, tag = 'scoped memory for tpu_custom_call.1']
    #allocation5 [shape = 'u8[8192]{0}', space=vmem, size = 0x2000, scoped, tag = 'input window, operand 1, single buffered']
    #allocation6 [shape = 's32[1]{0}', space=sflag, size = 0x4, scoped, tag = 'scoped memory for tpu_custom_call.1']
    #allocation7 [shape = 'u8[8192]{0}', space=vmem, size = 0x2000, scoped, tag = 'output window, operand 0, single buffered']
    %7 = vsyncpa [#allocation3], 0
    %8 = vsyncpa [#allocation6], 0
    %9 = vsyncpa [#allocation4], 0
    // Predicated region
    $region2: #{tpu_custom_call.1} parent=1 // pred_check
      _
    $region3: #{tpu_custom_call.1} parent=1 // pred_check_branch
      %11 = sbr.rel (0) target = $region5
    $region4: #{tpu_custom_call.1} parent=1 // pred_region
      %s12 = sadd.s32 0, 0
      %p13 = scmp.lt.s32.totalorder %s12, 0
      %s14 = scalar_select %p13, %s12, 0
      %s15 = smul.u32 2, %s14
      %17 = vsyncadd [#allocation3], 0
      %s18 = smul.addr %s15, 8
      %s19 = scalar_lea.hbm %s0, %s18
      %s20 = sshll.u32 %s19, 4
      %s21 = int_to_ptr.hbm [resolvable:$true] %s20
      %s22 = sshll.u32 [#allocation2], 4
      %s23 = int_to_ptr.vmem [resolvable:$true] %s22
      %28 = dma.hbm_to_vmem [thread:$0]  %s21, 256, %s23, [#allocation3], 128, 128, 8
    $region5: #{tpu_custom_call.1} parent=1 // pred_fallthru
      _
    // Predicated region
    $region6: #{tpu_custom_call.1} parent=1 // pred_check
      _
    $region7: #{tpu_custom_call.1} parent=1 // pred_check_branch
      %30 = sbr.rel (0) target = $region9
    $region8: #{tpu_custom_call.1} parent=1 // pred_region
      %s31 = sadd.s32 0, 0
      %p32 = scmp.lt.s32.totalorder %s31, 0
      %s33 = scalar_select %p32, %s31, 0
      %s34 = smul.u32 2, %s33
      %36 = vsyncadd [#allocation6], 0
      %s37 = smul.addr %s34, 8
      %s38 = scalar_lea.hbm %s1, %s37
      %s39 = sshll.u32 %s38, 4
      %s40 = int_to_ptr.hbm [resolvable:$true] %s39
      %s41 = sshll.u32 [#allocation5], 4
      %s42 = int_to_ptr.vmem [resolvable:$true] %s41
      %47 = dma.hbm_to_vmem [thread:$0]  %s40, 256, %s42, [#allocation6], 128, 128, 8
    $region9: #{tpu_custom_call.1} parent=1 // pred_fallthru
      _
    // Predicated region
    $region10: #{tpu_custom_call.1} parent=1 // pred_check
      _
    $region11: #{tpu_custom_call.1} parent=1 // pred_check_branch
      %49 = sbr.rel (0) target = $region13
    $region12: #{tpu_custom_call.1} parent=1 // pred_region
      %51 = dma.done [#allocation3], 256
    $region13: #{tpu_custom_call.1} parent=1 // pred_fallthru
      _
    // Predicated region
    $region14: #{tpu_custom_call.1} parent=1 // pred_check
      _
    $region15: #{tpu_custom_call.1} parent=1 // pred_check_branch
      %53 = sbr.rel (0) target = $region17
    $region16: #{tpu_custom_call.1} parent=1 // pred_region
      %55 = dma.done [#allocation6], 256
    $region17: #{tpu_custom_call.1} parent=1 // pred_fallthru
      _
    %s56 = sadd.s32 0, 0
    %p57 = scmp.lt.s32.totalorder %s56, 0
    %s58 = scalar_select %p57, %s56, 0
    %s59 = smul.u32 2, %s58
    %s60 = sadd.s32 0, 0
    %p61 = scmp.lt.s32.totalorder %s60, 0
    %s62 = scalar_select %p61, %s60, 0
    %s63 = smul.u32 2, %s62
    %p64 = scmp.eq.s32.totalorder 0, 0
    // Predicated region
    $region18: #{tpu_custom_call.1} parent=1 // pred_check
      %p65 = pneg %p64
    $region19: #{tpu_custom_call.1} parent=1 // pred_check_branch
      %67 = sbr.rel (%p65) target = $region21
    $region20: #{tpu_custom_call.1} parent=1 // pred_region
      %68 = vst [vmem:[#allocation7] sm:$0xff] 0.0
      %69 = vst [vmem:[#allocation7 + $0x8] sm:$0xff] 0.0
    $region21: #{tpu_custom_call.1} parent=1 // pred_fallthru
      _
    %v70 = vld [vmem:[#allocation2] sm:$0xff]
    %v71 = vld [vmem:[#allocation2 + $0x8] sm:$0xff]
    %v72 = vld [vmem:[#allocation5] sm:$0xff]
    %v73 = vld [vmem:[#allocation5 + $0x8] sm:$0xff]
    %v74 = vmul.f32 %v70, %v72
    %v75 = vmul.f32 %v71, %v73
    %v76 = vadd.f32 %v74, %v75
    %v77 = vmul.f32 %v72, %v72
    %v78 = vmul.f32 %v73, %v73
    %v79 = vadd.f32 %v77, %v78
    %v80 = vadd.f32 %v76, 0.0
    %v81 = vadd.f32 %v79, 0.0
    %v82 = vld [vmem:[#allocation7] sm:$0xff]
    %v83 = vadd.f32 %v82, %v80
    %84 = vst [vmem:[#allocation7] sm:$0xff] %v83
    %s85 = scalar_lea.vmem [#allocation7], 8
    %v86 = vld [vmem:[%s85] sm:$0xff]
    %v87 = vadd.f32 %v86, %v81
    %88 = vst [vmem:[%s85] sm:$0xff] %v87
    // Predicated region
    $region22: #{tpu_custom_call.1} parent=1 // pred_check
      _
    $region23: #{tpu_custom_call.1} parent=1 // pred_check_branch
      %90 = sbr.rel (0) target = $region25
    $region24: #{tpu_custom_call.1} parent=1 // pred_region
      %92 = vsyncadd [#allocation4], 0
      %s93 = sshll.u32 [#allocation7], 4
      %s94 = int_to_ptr.vmem [resolvable:$true] %s93
      %s95 = sshll.u32 %s2, 4
      %s96 = int_to_ptr.hbm [resolvable:$true] %s95
      %101 = dma.vmem_to_hbm [thread:$0]  %s94, 256, %s96, [#allocation4], 128, 128, 8
    $region25: #{tpu_custom_call.1} parent=1 // pred_fallthru
      _
    // Predicated region
    $region26: #{tpu_custom_call.1} parent=1 // pred_check
      _
    $region27: #{tpu_custom_call.1} parent=1 // pred_check_branch
      %103 = sbr.rel (0) target = $region29
    $region28: #{tpu_custom_call.1} parent=1 // pred_region
      %105 = dma.done [#allocation4], 256
    $region29: #{tpu_custom_call.1} parent=1 // pred_fallthru
      _
    %106 = vsyncpa [#allocation3], 1
    %107 = vsyncpa [#allocation6], 1
    %108 = vsyncpa [#allocation4], 1

</llo_original>
